<compile_context>
chip_gen: v5e
topology: v5e:2x2
jax: 0.10.0
libtpu: 0.0.40
codegen_flags: <defaults>
</compile_context>

<pallas_src>
import functools

import jax
import jax.numpy as jnp
from jax.experimental import pallas as pl
from jax.experimental.pallas import tpu as pltpu


def _rows_per_block(dtype):
    """Sublane-dense output tiles: 8 rows/vreg for 4-byte dtypes, 16 for
    2-byte, 32 for 1-byte -> unmasked vst + fewer writeback DMAs."""
    itemsize = jnp.dtype(dtype).itemsize
    return {4: 8, 2: 16, 1: 32}.get(itemsize, 8)


def _vmem_gather_kernel(ids_ref, table_ref, out_ref, *, rows_per_block):
    """Small-table fast path: whole combined table resident in VMEM
    (constant index_map); gather R rows per grid step."""
    base = pl.program_id(0) * rows_per_block
    for r in range(rows_per_block):               # small static R -> unrolled
        idx = ids_ref[base + r]                   # scalar read from SMEM
        out_ref[pl.ds(r, 1), :] = table_ref[pl.ds(idx, 1), :]


def _hbm_gather_kernel(ids_ref, table_hbm, out_ref, row_buf, sem,
                       *, rows_per_block):
    """Large-table path: table stays in HBM; R row DMAs per block are all
    started before any wait (R fetches in flight), landed in a VMEM row
    buffer, then written as one sublane-dense (R, D) output block."""
    base = pl.program_id(0) * rows_per_block
    copies = []
    for r in range(rows_per_block):               # issue all fetches first...
        idx = ids_ref[base + r]
        cp = pltpu.make_async_copy(table_hbm.at[pl.ds(idx, 1), :],
                                   row_buf.at[pl.ds(r, 1), :],
                                   sem.at[r])
        cp.start()
        copies.append(cp)
    for cp in copies:                             # ...then wait on all
        cp.wait()
    out_ref[...] = row_buf[...]


def build_combined_table(weight, external_embeddings=()):
    """Build the combined lookup table [wrapped ; ext_1 ; ext_2 ; ...] plus
    per-external (start, end, row_offset, num_rows) metadata.

    Call this ONCE at registration time (the module's add_embeddings), not
    per forward, so the concatenate never sits on the forward path.
    """
    tables = [weight]
    ranges = []
    off = weight.shape[0]
    for emb in external_embeddings:
        e = jnp.asarray(emb["embedding"], dtype=weight.dtype)
        ranges.append((int(emb["start"]), int(emb["end"]), off, int(e.shape[0])))
        tables.append(e)
        off += int(e.shape[0])
    table = jnp.concatenate(tables, axis=0) if len(tables) > 1 else weight
    return table, tuple(ranges)


def _remap_ids(input_ids, num_embeddings, ranges, table_rows):
    """Map raw token ids to rows of the combined table (pure elementwise)."""
    ids = input_ids.astype(jnp.int32)
    # replace_input_ids: OOV ids -> row 0 of the wrapped weight.
    rid = jnp.where(ids >= num_embeddings, 0, ids)
    # replace_embeddings: ids in [start, end) read that external's rows.
    for start, end, off, rows in ranges:
        in_range = jnp.logical_and(ids >= start, ids < end)
        local = jnp.clip(ids - start, 0, rows - 1)
        rid = jnp.where(in_range, local + off, rid)
    # Safety clamp: negative / malformed ids must never drive the row DMA
    # out of bounds (DMA bounds checks are the only default runtime check).
    return jnp.clip(rid, 0, table_rows - 1)


def embedding_with_fixes(input_ids, table, num_embeddings, ranges,
                         force_hbm_path=False):
    """Forward of EmbeddingLayerWithFixes.

    input_ids: [B, L] or [L] integer token ids
    table:     [V_total, D] combined table from build_combined_table
    ranges:    per-external (start, end, row_offset, num_rows)
    """
    if input_ids.ndim == 1:
        input_ids = input_ids[None, :]            # matches torch .unsqueeze(0)
    B, L = input_ids.shape
    V, D = table.shape
    dtype = table.dtype
    itemsize = jnp.dtype(dtype).itemsize

    R = _rows_per_block(dtype)
    T = B * L
    n_blocks = pl.cdiv(T, R)
    T_pad = n_blocks * R

    rid = _remap_ids(input_ids, num_embeddings, ranges, V).reshape(-1)
    if T_pad != T:
        rid = jnp.pad(rid, (0, T_pad - T))        # padded tokens read row 0

    table_bytes = V * D * itemsize
    out_block_bytes = R * D * itemsize

    # Per-generation VMEM budget for the resident-table fast path
    # (v7x has 64 MiB physical per TC vs 128 MiB on v5e/v6e).
    try:
        info = pltpu.get_tpu_info()
        vmem_cap = int(getattr(info, "vmem_capacity_bytes", 64 << 20))
    except Exception:
        vmem_cap = 64 << 20                       # v7x worst case
    fast_budget = min(vmem_cap // 2, 48 << 20)
    # Budget 2x table (pipeline buffering) + double-buffered output + slack.
    fast_need = 2 * table_bytes + 2 * out_block_bytes + (1 << 20)

    use_fast_path = (fast_need <= fast_budget) and not force_hbm_path

    if use_fast_path:
        kernel = functools.partial(_vmem_gather_kernel, rows_per_block=R)
        out_flat = pl.pallas_call(
            kernel,
            out_shape=jax.ShapeDtypeStruct((T_pad, D), dtype),
            grid_spec=pltpu.PrefetchScalarGridSpec(
                num_scalar_prefetch=1,            # rid -> SMEM
                grid=(n_blocks,),
                in_specs=[
                    # Whole table, constant block index -> fetched once and
                    # kept resident in VMEM across the grid.
                    pl.BlockSpec((V, D), lambda tb, ids: (0, 0)),
                ],
                out_specs=pl.BlockSpec((R, D), lambda tb, ids: (tb, 0)),
            ),
            compiler_params=pltpu.CompilerParams(
                dimension_semantics=("parallel",),
                vmem_limit_bytes=int(min(vmem_cap, fast_need + (16 << 20))),
            ),
        )(rid, table)
    else:
        kernel = functools.partial(_hbm_gather_kernel, rows_per_block=R)
        out_flat = pl.pallas_call(
            kernel,
            out_shape=jax.ShapeDtypeStruct((T_pad, D), dtype),
            grid_spec=pltpu.PrefetchScalarGridSpec(
                num_scalar_prefetch=1,            # rid -> SMEM
                grid=(n_blocks,),
                in_specs=[pl.BlockSpec(memory_space=pl.ANY)],  # table in HBM
                out_specs=pl.BlockSpec((R, D), lambda tb, ids: (tb, 0)),
                scratch_shapes=[
                    pltpu.VMEM((R, D), dtype),
                    pltpu.SemaphoreType.DMA((R,)),
                ],
            ),
            compiler_params=pltpu.CompilerParams(
                dimension_semantics=("parallel",)),
        )(rid, table)

    if T_pad != T:
        out_flat = out_flat[:T]
    return out_flat.reshape(B, L, D)


def _reference(input_ids, weight, external_embeddings):
    """Pure-JAX reference mirroring the PyTorch forward."""
    if input_ids.ndim == 1:
        input_ids = input_ids[None, :]
    ids_fwd = jnp.where(input_ids >= weight.shape[0], 0, input_ids)
    out = weight[ids_fwd]
    for emb in external_embeddings:
        start, end = int(emb["start"]), int(emb["end"])
        e = jnp.asarray(emb["embedding"], weight.dtype)
        mask = (input_ids >= start) & (input_ids < end)
        gathered = e[jnp.clip(input_ids - start, 0, e.shape[0] - 1)]
        out = jnp.where(mask[..., None], gathered, out)
    return out


if __name__ == "__main__":
    key = jax.random.PRNGKey(0)
    k_w, k_e2 = jax.random.split(key)

    num_embeddings, hidden = 32, 128     # wrapped nn.Embedding(32, 128)
    B, L = 2, 8

    weight = jax.random.normal(k_w, (num_embeddings, hidden), dtype=jnp.float32)

    # Two external (placeholder-token) embeddings, deterministic values.
    externals = [
        {"name": "ngapi", "start": 32, "end": 36,
         "embedding": jnp.full((4, hidden), 2.3, dtype=jnp.float32)},
        {"name": "kwaheri", "start": 40, "end": 42,
         "embedding": jax.random.normal(k_e2, (2, hidden), dtype=jnp.float32)},
    ]
    # TODO(synk): add_embeddings' duplicate-name / id-overlap asserts,
    # trainable-parameter registration and logging are module bookkeeping
    # (not forward compute) and are not reproduced here; the per-span
    # data-dependent assert in replace_embeddings is assumed validated
    # upstream (well-formed contiguous spans).

    # "Registration time": build/cache the combined table ONCE, not per call.
    table, ranges = build_combined_table(weight, externals)

    input_ids = jnp.array(
        [[5, 1, 32, 33, 34, 35, 7, 2],
         [32, 33, 34, 35, 40, 41, 3, 9]], dtype=jnp.int32)

    ref = _reference(input_ids, weight, externals)

    # Fast path: combined table resident in VMEM.
    out = embedding_with_fixes(input_ids, table, num_embeddings, ranges)
    out = jax.block_until_ready(out)
    assert out.shape == (B, L, hidden)
    assert jnp.allclose(out, ref, atol=1e-5, rtol=1e-5)
    assert jnp.allclose(out[0, 2:6], 2.3, atol=1e-5)   # 'ngapi' span replaced

    # Large-table path: table stays in HBM, batched manual row-DMA gather.
    out_hbm = embedding_with_fixes(input_ids, table, num_embeddings, ranges,
                                   force_hbm_path=True)
    out_hbm = jax.block_until_ready(out_hbm)
    assert jnp.allclose(out_hbm, ref, atol=1e-5, rtol=1e-5)

    print("KERNEL_OK")
</pallas_src>

<mosaic_0001>
module attributes {stable_mosaic.version = 11 : i64} {
  func.func @_vmem_gather_kernel(%arg0: i32, %arg1: memref<16xi32, #tpu.memory_space<smem>>, %arg2: memref<38x128xf32, #tpu.memory_space<vmem>>, %arg3: memref<8x128xf32, #tpu.memory_space<vmem>>) attributes {dimension_semantics = [#tpu.dimension_semantics<parallel>], iteration_bounds = array<i64: 2>, scalar_prefetch = 1 : i64, scratch_operands = 0 : i64, tpu.core_type = #tpu.core_type<tc>, window_params = [{pipeline_mode = #tpu.pipeline_mode<synchronous>, transform_indices = @transform_0, window_bounds = array<i64: 38, 128>}, {transform_indices = @transform_1, window_bounds = array<i64: 8, 128>}]} {
    %c8_i32 = arith.constant 8 : i32
    %0 = arith.muli %arg0, %c8_i32 : i32
    %c0_i32 = arith.constant 0 : i32
    %1 = arith.addi %0, %c0_i32 : i32
    %2 = arith.index_cast %1 : i32 to index
    %3 = memref.load %arg1[%2] : memref<16xi32, #tpu.memory_space<smem>>
    %4 = arith.index_cast %3 : i32 to index
    %c0 = arith.constant 0 : index
    %5 = vector.load %arg2[%4, %c0] : memref<38x128xf32, #tpu.memory_space<vmem>>, vector<1x128xf32>
    %c0_0 = arith.constant 0 : index
    %c0_1 = arith.constant 0 : index
    %6 = vector.load %arg3[%c0_0, %c0_1] : memref<8x128xf32, #tpu.memory_space<vmem>>, vector<1x128xf32>
    tpu.vector_store %arg3[%c0_0, %c0_1], %5 {strides = array<i32>} : memref<8x128xf32, #tpu.memory_space<vmem>>, vector<1x128xf32>,
    %c1_i32 = arith.constant 1 : i32
    %7 = arith.addi %0, %c1_i32 : i32
    %8 = arith.index_cast %7 : i32 to index
    %9 = memref.load %arg1[%8] : memref<16xi32, #tpu.memory_space<smem>>
    %10 = arith.index_cast %9 : i32 to index
    %c0_2 = arith.constant 0 : index
    %11 = vector.load %arg2[%10, %c0_2] : memref<38x128xf32, #tpu.memory_space<vmem>>, vector<1x128xf32>
    %c1 = arith.constant 1 : index
    %c0_3 = arith.constant 0 : index
    %12 = vector.load %arg3[%c1, %c0_3] : memref<8x128xf32, #tpu.memory_space<vmem>>, vector<1x128xf32>
    tpu.vector_store %arg3[%c1, %c0_3], %11 {strides = array<i32>} : memref<8x128xf32, #tpu.memory_space<vmem>>, vector<1x128xf32>,
    %c2_i32 = arith.constant 2 : i32
    %13 = arith.addi %0, %c2_i32 : i32
    %14 = arith.index_cast %13 : i32 to index
    %15 = memref.load %arg1[%14] : memref<16xi32, #tpu.memory_space<smem>>
    %16 = arith.index_cast %15 : i32 to index
    %c0_4 = arith.constant 0 : index
    %17 = vector.load %arg2[%16, %c0_4] : memref<38x128xf32, #tpu.memory_space<vmem>>, vector<1x128xf32>
    %c2 = arith.constant 2 : index
    %c0_5 = arith.constant 0 : index
    %18 = vector.load %arg3[%c2, %c0_5] : memref<8x128xf32, #tpu.memory_space<vmem>>, vector<1x128xf32>
    tpu.vector_store %arg3[%c2, %c0_5], %17 {strides = array<i32>} : memref<8x128xf32, #tpu.memory_space<vmem>>, vector<1x128xf32>,
    %c3_i32 = arith.constant 3 : i32
    %19 = arith.addi %0, %c3_i32 : i32
    %20 = arith.index_cast %19 : i32 to index
    %21 = memref.load %arg1[%20] : memref<16xi32, #tpu.memory_space<smem>>
    %22 = arith.index_cast %21 : i32 to index
    %c0_6 = arith.constant 0 : index
    %23 = vector.load %arg2[%22, %c0_6] : memref<38x128xf32, #tpu.memory_space<vmem>>, vector<1x128xf32>
    %c3 = arith.constant 3 : index
    %c0_7 = arith.constant 0 : index
    %24 = vector.load %arg3[%c3, %c0_7] : memref<8x128xf32, #tpu.memory_space<vmem>>, vector<1x128xf32>
    tpu.vector_store %arg3[%c3, %c0_7], %23 {strides = array<i32>} : memref<8x128xf32, #tpu.memory_space<vmem>>, vector<1x128xf32>,
    %c4_i32 = arith.constant 4 : i32
    %25 = arith.addi %0, %c4_i32 : i32
    %26 = arith.index_cast %25 : i32 to index
    %27 = memref.load %arg1[%26] : memref<16xi32, #tpu.memory_space<smem>>
    %28 = arith.index_cast %27 : i32 to index
    %c0_8 = arith.constant 0 : index
    %29 = vector.load %arg2[%28, %c0_8] : memref<38x128xf32, #tpu.memory_space<vmem>>, vector<1x128xf32>
    %c4 = arith.constant 4 : index
    %c0_9 = arith.constant 0 : index
    %30 = vector.load %arg3[%c4, %c0_9] : memref<8x128xf32, #tpu.memory_space<vmem>>, vector<1x128xf32>
    tpu.vector_store %arg3[%c4, %c0_9], %29 {strides = array<i32>} : memref<8x128xf32, #tpu.memory_space<vmem>>, vector<1x128xf32>,
    %c5_i32 = arith.constant 5 : i32
    %31 = arith.addi %0, %c5_i32 : i32
    %32 = arith.index_cast %31 : i32 to index
    %33 = memref.load %arg1[%32] : memref<16xi32, #tpu.memory_space<smem>>
    %34 = arith.index_cast %33 : i32 to index
    %c0_10 = arith.constant 0 : index
    %35 = vector.load %arg2[%34, %c0_10] : memref<38x128xf32, #tpu.memory_space<vmem>>, vector<1x128xf32>
    %c5 = arith.constant 5 : index
    %c0_11 = arith.constant 0 : index
    %36 = vector.load %arg3[%c5, %c0_11] : memref<8x128xf32, #tpu.memory_space<vmem>>, vector<1x128xf32>
    tpu.vector_store %arg3[%c5, %c0_11], %35 {strides = array<i32>} : memref<8x128xf32, #tpu.memory_space<vmem>>, vector<1x128xf32>,
    %c6_i32 = arith.constant 6 : i32
    %37 = arith.addi %0, %c6_i32 : i32
    %38 = arith.index_cast %37 : i32 to index
    %39 = memref.load %arg1[%38] : memref<16xi32, #tpu.memory_space<smem>>
    %40 = arith.index_cast %39 : i32 to index
    %c0_12 = arith.constant 0 : index
    %41 = vector.load %arg2[%40, %c0_12] : memref<38x128xf32, #tpu.memory_space<vmem>>, vector<1x128xf32>
    %c6 = arith.constant 6 : index
    %c0_13 = arith.constant 0 : index
    %42 = vector.load %arg3[%c6, %c0_13] : memref<8x128xf32, #tpu.memory_space<vmem>>, vector<1x128xf32>
    tpu.vector_store %arg3[%c6, %c0_13], %41 {strides = array<i32>} : memref<8x128xf32, #tpu.memory_space<vmem>>, vector<1x128xf32>,
    %c7_i32 = arith.constant 7 : i32
    %43 = arith.addi %0, %c7_i32 : i32
    %44 = arith.index_cast %43 : i32 to index
    %45 = memref.load %arg1[%44] : memref<16xi32, #tpu.memory_space<smem>>
    %46 = arith.index_cast %45 : i32 to index
    %c0_14 = arith.constant 0 : index
    %47 = vector.load %arg2[%46, %c0_14] : memref<38x128xf32, #tpu.memory_space<vmem>>, vector<1x128xf32>
    %c7 = arith.constant 7 : index
    %c0_15 = arith.constant 0 : index
    %48 = vector.load %arg3[%c7, %c0_15] : memref<8x128xf32, #tpu.memory_space<vmem>>, vector<1x128xf32>
    tpu.vector_store %arg3[%c7, %c0_15], %47 {strides = array<i32>} : memref<8x128xf32, #tpu.memory_space<vmem>>, vector<1x128xf32>,
    return
  }
  func.func @transform_0(%arg0: i32, %arg1: memref<16xi32, #tpu.memory_space<smem>>) -> (i32, i32) {
    %c0_i32 = arith.constant 0 : i32
    %c0_i32_0 = arith.constant 0 : i32
    %c0_i32_1 = arith.constant 0 : i32
    return %c0_i32, %c0_i32_0 : i32, i32
  }
  func.func @transform_1(%arg0: i32, %arg1: memref<16xi32, #tpu.memory_space<smem>>) -> (i32, i32) {
    %c0_i32 = arith.constant 0 : i32
    %c0_i32_0 = arith.constant 0 : i32
    return %arg0, %c0_i32 : i32, i32
  }
}

</mosaic_0001>

<llo_original>
// kernel: tpu_custom_call.1
$region0: #{tpu_custom_call.1}
  #allocation0 [shape = 'u32[]', space=smem, size = 0x4, offset = 0x4, fixed_abs, tag = 'smem constant byte address 0x4 - core index']
  #allocation1 [shape = 'u32[72,128]{1,0:T(1,128)}', space=vmem, size = 0x9000, scoped, tag = 'internal scratch']
  #allocation2 [shape = 's32[1]{0}', space=sflag, size = 0x4, scoped, tag = 'scoped memory for tpu_custom_call.1']
  #allocation3 [shape = 'u8[512]{0}', space=smem, size = 0x200, scoped, tag = 'prefetched SMEM operand 0']
  %s0 = inlined_call_operand.hbm [shape: s32[16], index: 0, kind: input, shape index: {}]
  %s1 = inlined_call_operand.hbm [shape: f32[38,128], index: 1, kind: input, shape index: {}]
  %s2 = inlined_call_operand.hbm [shape: f32[16,128], index: 2, kind: output, shape index: {}]
  %s3 = sld [smem:[#allocation0]]
  $region41: #{tpu_custom_call.1} parent=0
    _
  %s5 = ssub.s32 1, %s3
  %s6 = scalar_select 0, %s5, %s3
  %s8 = sshll.u32 %s0, 4
  %s9 = int_to_ptr.hbm [resolvable:$true] %s8
  %11 = dma.hbm_to_smem %s9, 16, [#allocation3], [#allocation2]
  %13 = dma.done [#allocation2], 16
  %14 = sfence
  $region1: #{tpu_custom_call.1} parent=0
    #allocation4 [shape = 'u8[20480]{0}', space=vmem, size = 0x5000, scoped, tag = 'input window, operand 1, single buffered']
    #allocation5 [shape = 's32[2]{0}', space=sflag, size = 0x8, scoped, tag = 'scoped memory for tpu_custom_call.1']
    #allocation6 [shape = 's32[2]{0}', space=sflag, size = 0x8, scoped, tag = 'scoped memory for tpu_custom_call.1']
    #allocation7 [shape = 'u8[8192]{0}', space=vmem, size = 0x2000, scoped, tag = 'output window, operand 0']
    %15 = vsyncpa [#allocation5], 0
    %16 = vsyncpa [#allocation6], 0
    %s17 = scalar_lea.sflag [#allocation6], 1
    %18 = vsyncpa %s17, 0
    loop: start=0, step=1, limit=4
    $region2: #{tpu_custom_call.1} parent=1 // loop_pre_header
      _
    $region3: #{tpu_custom_call.1} parent=1 // loop_header
      %s20 = sphi 0, %s24
      %p21 = scmp.ge.s32.totalorder %s20, 4
      %s28 = sphi 0, %s28
      %s30 = sphi 0, %s28
      %s31 = sphi 0, %s30
      %s45 = sphi 0, %s31
      %s51 = sphi 0, %s53
      %s54 = sphi 0, %s51
      %s55 = sphi 0, %s54
      %s71 = sphi 0, %s55
    $region4: #{tpu_custom_call.1} parent=1 // loop_header_branch
      %23 = sbr.rel (%p21) target = $region8
    $region5: #{tpu_custom_call.1} parent=1 // loop_body
      %s25 = ssub.s32 %s20, 1
      %s26 = ssub.s32 %s20, 2
      %s27 = sadd.s32 %s20, 1
      %s29 = sadd.s32 %s28, 1
      %p32 = scmp.eq.s32.totalorder %s20, 1
      %p33 = scmp.ne.s32.totalorder %s28, %s30
      %p34 = scmp.eq.s32.totalorder %s20, 0
      %p35 = por %p33, %p34
      %p36 = scmp.ne.s32.totalorder %s28, %s30
      %p37 = scmp.eq.s32.totalorder %s25, 1
      %p38 = por %p36, %p37
      %p39 = scmp.ne.s32.totalorder %s30, %s31
      %p40 = scmp.eq.s32.totalorder %s25, 0
      %p41 = por %p39, %p40
      %p42 = scmp.ne.s32.totalorder %s30, %s31
      %p43 = scmp.eq.s32.totalorder %s26, 1
      %p44 = por %p42, %p43
      %p46 = scmp.ne.s32.totalorder %s31, %s45
      %p47 = scmp.eq.s32.totalorder %s26, 0
      %p48 = por %p46, %p47
      %s49 = ssub.s32 %s20, %s27
      %p50 = scmp.eq.s32.totalorder %s49, 0
      %s52 = sadd.s32 %s51, 1
      %s53 = scalar_select %p50, %s51, %s52
      %p56 = pneg %p50
      %p57 = scmp.eq.s32.totalorder %s20, 1
      %p58 = por %p56, %p57
      %p59 = scmp.ne.s32.totalorder %s51, %s54
      %p60 = scmp.eq.s32.totalorder %s20, 0
      %p61 = por %p59, %p60
      %p62 = scmp.ne.s32.totalorder %s51, %s54
      %p63 = scmp.eq.s32.totalorder %s25, 1
      %p64 = por %p62, %p63
      %p65 = scmp.ne.s32.totalorder %s54, %s55
      %p66 = scmp.eq.s32.totalorder %s25, 0
      %p67 = por %p65, %p66
      %p68 = scmp.ne.s32.totalorder %s54, %s55
      %p69 = scmp.eq.s32.totalorder %s26, 1
      %p70 = por %p68, %p69
      %p72 = scmp.ne.s32.totalorder %s55, %s71
      %p73 = scmp.eq.s32.totalorder %s26, 0
      %p74 = por %p72, %p73
      %p75 = scmp.le.s32.totalorder 1, %s20
      %p76 = scmp.lt.s32.totalorder %s20, 3
      %p77 = pnand %p75, %p76
      %p78 = pneg %p77
      // Predicated region
      $region9: #{tpu_custom_call.1} parent=5 // pred_check
        _
      $region10: #{tpu_custom_call.1} parent=5 // pred_check_branch
        %80 = sbr.rel (%p77) target = $region12
      $region11: #{tpu_custom_call.1} parent=5 // pred_region
        %s81 = ssub.s32 %s20, 1
        // Predicated region
        $region13: #{tpu_custom_call.1} parent=11 // pred_check
          %p82 = pneg %p41
        $region14: #{tpu_custom_call.1} parent=11 // pred_check_branch
          %84 = sbr.rel (%p82) target = $region16
        $region15: #{tpu_custom_call.1} parent=11 // pred_region
          %86 = vsyncadd [#allocation5], 0
          %s87 = sshll.u32 %s1, 4
          %s88 = int_to_ptr.hbm [resolvable:$true] %s87
          %s89 = sshll.u32 [#allocation4], 4
          %s90 = int_to_ptr.vmem [resolvable:$true] %s89
          %95 = dma.hbm_to_vmem [thread:$0]  %s88, 640, %s90, [#allocation5], 128, 128, 8
        $region16: #{tpu_custom_call.1} parent=11 // pred_fallthru
          _
      $region12: #{tpu_custom_call.1} parent=5 // pred_fallthru
        _
      %p96 = scmp.lt.s32.totalorder %s20, 2
      // Predicated region
      $region17: #{tpu_custom_call.1} parent=5 // pred_check
        %p97 = pneg %p96
      $region18: #{tpu_custom_call.1} parent=5 // pred_check_branch
        %99 = sbr.rel (%p97) target = $region20
      $region19: #{tpu_custom_call.1} parent=5 // pred_region
        _
      $region20: #{tpu_custom_call.1} parent=5 // pred_fallthru
        _
      %p100 = scmp.le.s32.totalorder 1, %s20
      %p101 = scmp.lt.s32.totalorder %s20, 3
      %p102 = pnand %p100, %p101
      %p103 = pneg %p102
      // Predicated region
      $region21: #{tpu_custom_call.1} parent=5 // pred_check
        _
      $region22: #{tpu_custom_call.1} parent=5 // pred_check_branch
        %105 = sbr.rel (%p102) target = $region24
      $region23: #{tpu_custom_call.1} parent=5 // pred_region
        %s106 = ssub.s32 %s20, 1
        // Predicated region
        $region25: #{tpu_custom_call.1} parent=23 // pred_check
          %p107 = pneg %p41
        $region26: #{tpu_custom_call.1} parent=23 // pred_check_branch
          %109 = sbr.rel (%p107) target = $region28
        $region27: #{tpu_custom_call.1} parent=23 // pred_region
          %111 = dma.done [#allocation5], 640
        $region28: #{tpu_custom_call.1} parent=23 // pred_fallthru
          _
        %p112 = pneg %p41
        %p113 = pneg %p38
        %p114 = pneg %p67
        %p115 = pneg %p64
        %s116 = sand.u32 %s54, 1
        %s117 = scalar_lea.sflag [#allocation6], %s116
        %s118 = sand.u32 %s54, 1
        %s119 = smul.addr %s118, 8
        %s120 = scalar_lea.vmem [#allocation7], %s119
        %s121 = smul.u32 %s25, 8
        %s122 = sld [smem:[#allocation3 + %s121]]
        %s123 = scalar_lea.vmem [#allocation4], %s122
        %v124 = vld [vmem:[%s123] sm:$0x1]
        %125 = vst [vmem:[%s120] sm:$0x1] %v124
        %s126 = sadd.s32 %s121, 1
        %s127 = sld [smem:[#allocation3 + %s126]]
        %s128 = scalar_lea.vmem [#allocation4], %s127
        %v129 = vld [vmem:[%s128] sm:$0x1]
        %130 = vst [vmem:[%s120 + $0x1] sm:$0x1] %v129
        %s131 = sadd.s32 %s121, 2
        %s132 = sld [smem:[#allocation3 + %s131]]
        %s133 = scalar_lea.vmem [#allocation4], %s132
        %v134 = vld [vmem:[%s133] sm:$0x1]
        %135 = vst [vmem:[%s120 + $0x2] sm:$0x1] %v134
        %s136 = sadd.s32 %s121, 3
        %s137 = sld [smem:[#allocation3 + %s136]]
        %s138 = scalar_lea.vmem [#allocation4], %s137
        %v139 = vld [vmem:[%s138] sm:$0x1]
        %140 = vst [vmem:[%s120 + $0x3] sm:$0x1] %v139
        %s141 = sadd.s32 %s121, 4
        %s142 = sld [smem:[#allocation3 + %s141]]
        %s143 = scalar_lea.vmem [#allocation4], %s142
        %v144 = vld [vmem:[%s143] sm:$0x1]
        %145 = vst [vmem:[%s120 + $0x4] sm:$0x1] %v144
        %s146 = sadd.s32 %s121, 5
        %s147 = sld [smem:[#allocation3 + %s146]]
        %s148 = scalar_lea.vmem [#allocation4], %s147
        %v149 = vld [vmem:[%s148] sm:$0x1]
        %150 = vst [vmem:[%s120 + $0x5] sm:$0x1] %v149
        %s151 = sadd.s32 %s121, 6
        %s152 = sld [smem:[#allocation3 + %s151]]
        %s153 = scalar_lea.vmem [#allocation4], %s152
        %v154 = vld [vmem:[%s153] sm:$0x1]
        %155 = vst [vmem:[%s120 + $0x6] sm:$0x1] %v154
        %s156 = sadd.s32 %s121, 7
        %s157 = sld [smem:[#allocation3 + %s156]]
        %s158 = scalar_lea.vmem [#allocation4], %s157
        %v159 = vld [vmem:[%s158] sm:$0x1]
        %160 = vst [vmem:[%s120 + $0x7] sm:$0x1] %v159
        %s161 = sand.u32 %s54, 1
        %s162 = scalar_lea.sflag [#allocation6], %s161
        %s163 = sand.u32 %s54, 1
        %s164 = smul.addr %s163, 8
        %s165 = scalar_lea.vmem [#allocation7], %s164
        // Predicated region
        $region29: #{tpu_custom_call.1} parent=23 // pred_check
          %p166 = pneg %p64
        $region30: #{tpu_custom_call.1} parent=23 // pred_check_branch
          %168 = sbr.rel (%p166) target = $region32
        $region31: #{tpu_custom_call.1} parent=23 // pred_region
          %170 = vsyncadd %s162, 0
          %s171 = smul.addr %s25, 8
          %s172 = scalar_lea.hbm %s2, %s171
          %s174 = sshll.u32 %s165, 4
          %s175 = int_to_ptr.vmem [resolvable:$true] %s174
          %s176 = sshll.u32 %s172, 4
          %s177 = int_to_ptr.hbm [resolvable:$true] %s176
          %179 = dma.vmem_to_hbm [thread:$0]  %s175, 128, %s177, %s162
        $region32: #{tpu_custom_call.1} parent=23 // pred_fallthru
          _
      $region24: #{tpu_custom_call.1} parent=5 // pred_fallthru
        _
      %p180 = scmp.le.s32.totalorder 2, %s20
      // Predicated region
      $region33: #{tpu_custom_call.1} parent=5 // pred_check
        %p181 = pneg %p180
      $region34: #{tpu_custom_call.1} parent=5 // pred_check_branch
        %183 = sbr.rel (%p181) target = $region36
      $region35: #{tpu_custom_call.1} parent=5 // pred_region
        %s184 = ssub.s32 %s20, 2
        // Predicated region
        $region37: #{tpu_custom_call.1} parent=35 // pred_check
          %p185 = pneg %p70
        $region38: #{tpu_custom_call.1} parent=35 // pred_check_branch
          %187 = sbr.rel (%p185) target = $region40
        $region39: #{tpu_custom_call.1} parent=35 // pred_region
          %s188 = sand.u32 %s55, 1
          %s189 = scalar_lea.sflag [#allocation6], %s188
          %s190 = sand.u32 %s55, 1
          %s191 = smul.addr %s190, 8
          %s192 = scalar_lea.vmem [#allocation7], %s191
          %194 = dma.done %s189, 128
        $region40: #{tpu_custom_call.1} parent=35 // pred_fallthru
          _
      $region36: #{tpu_custom_call.1} parent=5 // pred_fallthru
        _
    $region6: #{tpu_custom_call.1} parent=1 // loop_footer
      %s24 = sadd.s32 1, %s20
    $region7: #{tpu_custom_call.1} parent=1 // loop_footer_branch
      %19 = sbr.rel target = $region3
    $region8: #{tpu_custom_call.1} parent=1 // loop_exit
      _
    %195 = vsyncpa [#allocation5], 1
    %s196 = scalar_lea.sflag [#allocation5], 1
    %197 = vsyncpa %s196, 1
    %198 = vsyncpa [#allocation6], 1
    %s199 = scalar_lea.sflag [#allocation6], 1
    %200 = vsyncpa %s199, 1

</llo_original>
